<compile_context>
chip_gen: v5e
topology: v5e:2x2
jax: 0.10.0
libtpu: 0.0.40
codegen_flags: <defaults>
</compile_context>

<pallas_src>
import jax
import jax.numpy as jnp
from jax.experimental import pallas as pl
from jax.experimental.pallas import tpu as pltpu

HIDDEN = 128
DROPOUT_P = 0.6
_KEEP_SCALE = 1.0 / (1.0 - DROPOUT_P)         # inverted-dropout scale (2.5)
_DROP_THRESHOLD = int(DROPOUT_P * (1 << 32))  # keep iff bits >= threshold  (P[keep] = 0.4)


# -------------------- kernels --------------------

def _value_kernel_eval(x_ref, w1_ref, b1_ref, w2_ref, b2_ref, o_ref):
    """Eval-mode forward: dropout is identity (PyTorch nn.Dropout in eval)."""
    h = jnp.dot(x_ref[...], w1_ref[...], preferred_element_type=jnp.float32)
    h = jnp.maximum(h + b1_ref[...], 0.0)                         # ReLU
    # 128 -> 1 value head: VPU multiply + cross-lane (XLU) reduction; MXU stays free.
    o_ref[...] = jnp.sum(h * w2_ref[...], axis=-1, keepdims=True) + b2_ref[0]


def _value_kernel_train(x_ref, w1_ref, b1_ref, w2_ref, b2_ref, bits_ref, o_ref):
    """Training-mode forward: inverted dropout (p=0.6) before ReLU.

    `bits_ref` holds uniform uint32 random bits; `keep = bits >= p * 2^32` gives
    keep-probability 1-p. The 1/(1-p) scale is pre-folded into w2 by the wrapper.
    """
    h = jnp.dot(x_ref[...], w1_ref[...], preferred_element_type=jnp.float32)
    h = h + b1_ref[...]
    keep = bits_ref[...] >= jnp.uint32(_DROP_THRESHOLD)           # integer threshold only
    h = jnp.where(keep, h, 0.0)                                   # dropout (scale in w2)
    h = jnp.maximum(h, 0.0)                                       # ReLU
    o_ref[...] = jnp.sum(h * w2_ref[...], axis=-1, keepdims=True) + b2_ref[0]


# -------------------- wrapper --------------------

def _round_up(x, m):
    return (x + m - 1) // m * m


def value_model_forward(state, params, *, training=False, rng_key=None, tile_b=512):
    """state: (B, obs) float32. Returns (B, 1) float32 state-value."""
    w1, b1, w2_row, b2 = params
    B, obs = state.shape

    # Batch tiling: big enough tiles for double-buffered pipelining, sized so
    # 2x buffered tiles stay far under v7x's 32 MiB scoped VMEM.
    tile = min(tile_b, _round_up(B, 8))
    b_pad = _round_up(B, tile)
    if b_pad != B:
        state = jnp.pad(state, ((0, b_pad - B), (0, 0)))
    grid = (b_pad // tile,)

    # bf16 inputs for the MXU matmul (halves HBM bytes for `state`); f32 accumulate.
    x = state.astype(jnp.bfloat16)
    w1_bf16 = w1.astype(jnp.bfloat16)

    x_spec = pl.BlockSpec((tile, obs), lambda i: (i, 0))
    w1_spec = pl.BlockSpec((obs, HIDDEN), lambda i: (0, 0))        # VMEM-resident
    b1_spec = pl.BlockSpec((1, HIDDEN), lambda i: (0, 0))
    w2_spec = pl.BlockSpec((1, HIDDEN), lambda i: (0, 0))
    b2_spec = pl.BlockSpec(memory_space=pltpu.MemorySpace.SMEM)    # single scalar
    out_spec = pl.BlockSpec((tile, 1), lambda i: (i, 0))

    compiler_params = pltpu.CompilerParams(
        dimension_semantics=("parallel",),       # shard batch tiles across both TCs on v7x
        vmem_limit_bytes=32 * 1024 * 1024,
    )
    out_shape = jax.ShapeDtypeStruct((b_pad, 1), jnp.float32)

    if not training:
        out = pl.pallas_call(
            _value_kernel_eval,
            grid=grid,
            in_specs=[x_spec, w1_spec, b1_spec, w2_spec, b2_spec],
            out_specs=out_spec,
            out_shape=out_shape,
            compiler_params=compiler_params,
        )(x, w1_bf16, b1, w2_row, b2)
    else:
        if rng_key is None:
            rng_key = jax.random.PRNGKey(0)
        bits = jax.random.bits(rng_key, (b_pad, HIDDEN), dtype=jnp.uint32)
        w2_scaled = w2_row * jnp.float32(_KEEP_SCALE)              # fold 1/(1-p) into the head
        bits_spec = pl.BlockSpec((tile, HIDDEN), lambda i: (i, 0))
        out = pl.pallas_call(
            _value_kernel_train,
            grid=grid,
            in_specs=[x_spec, w1_spec, b1_spec, w2_spec, b2_spec, bits_spec],
            out_specs=out_spec,
            out_shape=out_shape,
            compiler_params=compiler_params,
        )(x, w1_bf16, b1, w2_scaled, b2, bits)

    return out[:B] if b_pad != B else out


def init_params(key, observation_space_size):
    """Deterministic init mimicking torch.nn.Linear defaults (U(-1/sqrt(fan_in), +))."""
    k1, k2, k3, k4 = jax.random.split(key, 4)
    bound1 = 1.0 / (observation_space_size ** 0.5)
    bound2 = 1.0 / (HIDDEN ** 0.5)
    # w1 stored as (in, out); w2 stored as a (1, in) lane row; b2 as a flat scalar.
    w1 = jax.random.uniform(k1, (observation_space_size, HIDDEN), jnp.float32, -bound1, bound1)
    b1 = jax.random.uniform(k2, (1, HIDDEN), jnp.float32, -bound1, bound1)
    w2 = jax.random.uniform(k3, (1, HIDDEN), jnp.float32, -bound2, bound2)
    b2 = jax.random.uniform(k4, (1,), jnp.float32, -bound2, bound2)
    return w1, b1, w2, b2


# -------------------- demo / self-check --------------------

if __name__ == "__main__":
    OBS = 16   # observation_space_size
    B = 8      # batch of states

    key = jax.random.PRNGKey(0)
    k_param, k_state, k_drop = jax.random.split(key, 3)
    params = init_params(k_param, OBS)
    state = jax.random.normal(k_state, (B, OBS), dtype=jnp.float32)
    w1, b1, w2_row, b2 = params

    # Reference uses the same bf16 input cast the kernel applies.
    xb = state.astype(jnp.bfloat16).astype(jnp.float32)
    w1b = w1.astype(jnp.bfloat16).astype(jnp.float32)

    # ---- eval path (dropout = identity, matches model.eval() semantics) ----
    value = jax.block_until_ready(value_model_forward(state, params, training=False))
    assert value.shape == (B, 1)
    h_ref = jnp.maximum(xb @ w1b + b1, 0.0)
    ref = jnp.sum(h_ref * w2_row, axis=-1, keepdims=True) + b2[0]
    assert jnp.allclose(value, ref, atol=1e-3, rtol=1e-3)

    # ---- train path (inverted dropout, p=0.6) ----
    value_tr = jax.block_until_ready(
        value_model_forward(state, params, training=True, rng_key=k_drop))
    assert value_tr.shape == (B, 1)
    bits = jax.random.bits(k_drop, (B, HIDDEN), dtype=jnp.uint32)  # B == b_pad here
    keep = bits >= jnp.uint32(_DROP_THRESHOLD)
    h_tr = jnp.maximum(jnp.where(keep, xb @ w1b + b1, 0.0), 0.0)
    ref_tr = jnp.sum(h_tr * (w2_row * _KEEP_SCALE), axis=-1, keepdims=True) + b2[0]
    assert jnp.allclose(value_tr, ref_tr, atol=1e-3, rtol=1e-3)

    print("KERNEL_OK")
</pallas_src>

<mosaic_0001>
module attributes {stable_mosaic.version = 11 : i64} {
  func.func @_value_kernel_eval(%arg0: i32, %arg1: memref<8x16xbf16, #tpu.memory_space<vmem>>, %arg2: memref<16x128xbf16, #tpu.memory_space<vmem>>, %arg3: memref<1x128xf32, #tpu.memory_space<vmem>>, %arg4: memref<1x128xf32, #tpu.memory_space<vmem>>, %arg5: memref<1xf32, #tpu.memory_space<smem>>, %arg6: memref<8x1xf32, #tpu.memory_space<vmem>>) attributes {dimension_semantics = [#tpu.dimension_semantics<parallel>], iteration_bounds = array<i64: 1>, scalar_prefetch = 0 : i64, scratch_operands = 0 : i64, tpu.core_type = #tpu.core_type<tc>, window_params = [{transform_indices = @transform_0, window_bounds = array<i64: 8, 16>}, {pipeline_mode = #tpu.pipeline_mode<synchronous>, transform_indices = @transform_1, window_bounds = array<i64: 16, 128>}, {pipeline_mode = #tpu.pipeline_mode<synchronous>, transform_indices = @transform_2, window_bounds = array<i64: 1, 128>}, {pipeline_mode = #tpu.pipeline_mode<synchronous>, transform_indices = @transform_3, window_bounds = array<i64: 1, 128>}, {transform_indices = @transform_4, window_bounds = array<i64: 1>}, {transform_indices = @transform_5, window_bounds = array<i64: 8, 1>}]} {
    %c0 = arith.constant 0 : index
    %c0_0 = arith.constant 0 : index
    %0 = vector.load %arg1[%c0, %c0_0] : memref<8x16xbf16, #tpu.memory_space<vmem>>, vector<8x16xbf16>
    %c0_1 = arith.constant 0 : index
    %c0_2 = arith.constant 0 : index
    %1 = vector.load %arg2[%c0_1, %c0_2] : memref<16x128xbf16, #tpu.memory_space<vmem>>, vector<16x128xbf16>
    %cst = arith.constant dense<0.000000e+00> : vector<8x128xf32>
    %2 = tpu.matmul %0, %1, %cst {dimension_numbers = #tpu.dot_dimension_numbers<[1], [0], [0], [1], [0, 0, 1, 1], [], []>} : vector<8x16xbf16>, vector<16x128xbf16>, vector<8x128xf32> -> vector<8x128xf32>
    %c0_3 = arith.constant 0 : index
    %c0_4 = arith.constant 0 : index
    %3 = vector.load %arg3[%c0_3, %c0_4] : memref<1x128xf32, #tpu.memory_space<vmem>>, vector<1x128xf32>
    %4 = vector.broadcast %3 : vector<1x128xf32> to vector<8x128xf32>
    %5 = arith.addf %2, %4 : vector<8x128xf32>
    %cst_5 = arith.constant 0.000000e+00 : f32
    %6 = vector.broadcast %cst_5 : f32 to vector<8x128xf32>
    %7 = arith.maximumf %5, %6 : vector<8x128xf32>
    %c0_6 = arith.constant 0 : index
    %c0_7 = arith.constant 0 : index
    %8 = vector.load %arg4[%c0_6, %c0_7] : memref<1x128xf32, #tpu.memory_space<vmem>>, vector<1x128xf32>
    %9 = vector.broadcast %8 : vector<1x128xf32> to vector<8x128xf32>
    %10 = arith.mulf %7, %9 : vector<8x128xf32>
    %cst_8 = arith.constant dense<0.000000e+00> : vector<8xf32>
    %11 = vector.multi_reduction <add>, %10, %cst_8 [1] : vector<8x128xf32> to vector<8xf32>
    %12 = vector.shape_cast %11 : vector<8xf32> to vector<8x1xf32>
    %c0_9 = arith.constant 0 : index
    %13 = memref.load %arg5[%c0_9] : memref<1xf32, #tpu.memory_space<smem>>
    %14 = vector.broadcast %13 : f32 to vector<8x1xf32>
    %15 = arith.addf %12, %14 : vector<8x1xf32>
    %c0_10 = arith.constant 0 : index
    %c0_11 = arith.constant 0 : index
    %16 = vector.load %arg6[%c0_10, %c0_11] : memref<8x1xf32, #tpu.memory_space<vmem>>, vector<8x1xf32>
    tpu.vector_store %arg6[%c0_10, %c0_11], %15 {strides = array<i32>} : memref<8x1xf32, #tpu.memory_space<vmem>>, vector<8x1xf32>,
    return
  }
  func.func @transform_0(%arg0: i32) -> (i32, i32) {
    %c0_i32 = arith.constant 0 : i32
    %c0_i32_0 = arith.constant 0 : i32
    return %arg0, %c0_i32 : i32, i32
  }
  func.func @transform_1(%arg0: i32) -> (i32, i32) {
    %c0_i32 = arith.constant 0 : i32
    %c0_i32_0 = arith.constant 0 : i32
    %c0_i32_1 = arith.constant 0 : i32
    return %c0_i32, %c0_i32_0 : i32, i32
  }
  func.func @transform_2(%arg0: i32) -> (i32, i32) {
    %c0_i32 = arith.constant 0 : i32
    %c0_i32_0 = arith.constant 0 : i32
    %c0_i32_1 = arith.constant 0 : i32
    return %c0_i32, %c0_i32_0 : i32, i32
  }
  func.func @transform_3(%arg0: i32) -> (i32, i32) {
    %c0_i32 = arith.constant 0 : i32
    %c0_i32_0 = arith.constant 0 : i32
    %c0_i32_1 = arith.constant 0 : i32
    return %c0_i32, %c0_i32_0 : i32, i32
  }
  func.func @transform_4(%arg0: i32) -> i32 {
    %c0_i32 = arith.constant 0 : i32
    %c0_i32_0 = arith.constant 0 : i32
    return %c0_i32 : i32
  }
  func.func @transform_5(%arg0: i32) -> (i32, i32) {
    %c0_i32 = arith.constant 0 : i32
    %c0_i32_0 = arith.constant 0 : i32
    return %arg0, %c0_i32 : i32, i32
  }
}

</mosaic_0001>

<llo_original>
// kernel: tpu_custom_call.1
$region0: #{tpu_custom_call.1}
  #allocation0 [shape = 'u32[]', space=smem, size = 0x4, offset = 0x4, fixed_abs, tag = 'smem constant byte address 0x4 - core index']
  #allocation1 [shape = 'u32[72,128]{1,0:T(1,128)}', space=vmem, size = 0x9000, scoped, tag = 'internal scratch']
  #allocation2 [shape = 'f32[1]{0:T(128)S(6)}', space=smem, size = 0x200, scoped, tag = 'scoped memory for tpu_custom_call.1']
  %s0 = inlined_call_operand.hbm [shape: bf16[8,16], index: 0, kind: input, shape index: {}]
  %s1 = inlined_call_operand.hbm [shape: bf16[16,128], index: 1, kind: input, shape index: {}]
  %s2 = inlined_call_operand.vmem [shape: f32[1,128], index: 2, kind: input, shape index: {}]
  %s3 = inlined_call_operand.vmem [shape: f32[1,128], index: 3, kind: input, shape index: {}]
  %s4 = inlined_call_operand.<no memory space> [shape: f32[1], index: 4, kind: input, shape index: {}]
  %s5 = inlined_call_operand.vmem [shape: f32[8,1], index: 5, kind: output, shape index: {}]
  %s6 = sld [smem:[#allocation0]]
  $region38: #{tpu_custom_call.1} parent=0
    _
  %s8 = ssub.s32 1, %s6
  %s9 = scalar_select 0, %s8, %s6
  %10 = sst [smem:[#allocation2]] %s4
  $region1: #{tpu_custom_call.1} parent=0
    #allocation3 [shape = 'u8[2048]{0}', space=vmem, size = 0x800, scoped, tag = 'input window, operand 0, single buffered']
    #allocation4 [shape = 's32[1]{0}', space=sflag, size = 0x4, scoped, tag = 'scoped memory for tpu_custom_call.1']
    #allocation5 [shape = 'u8[4096]{0}', space=vmem, size = 0x1000, scoped, tag = 'input window, operand 1, single buffered']
    #allocation6 [shape = 's32[1]{0}', space=sflag, size = 0x4, scoped, tag = 'scoped memory for tpu_custom_call.1']
    %11 = vsyncpa [#allocation4], 0
    %12 = vsyncpa [#allocation6], 0
    // Predicated region
    $region2: #{tpu_custom_call.1} parent=1 // pred_check
      _
    $region3: #{tpu_custom_call.1} parent=1 // pred_check_branch
      %14 = sbr.rel (0) target = $region5
    $region4: #{tpu_custom_call.1} parent=1 // pred_region
      %16 = vsyncadd [#allocation4], 0
      %s18 = sshll.u32 %s0, 4
      %s19 = int_to_ptr.hbm [resolvable:$true] %s18
      %s20 = sshll.u32 [#allocation3], 4
      %s21 = int_to_ptr.vmem [resolvable:$true] %s20
      %23 = dma.hbm_to_vmem [thread:$0]  %s19, 64, %s21, [#allocation4]
    $region5: #{tpu_custom_call.1} parent=1 // pred_fallthru
      _
    // Predicated region
    $region6: #{tpu_custom_call.1} parent=1 // pred_check
      _
    $region7: #{tpu_custom_call.1} parent=1 // pred_check_branch
      %25 = sbr.rel (0) target = $region9
    $region8: #{tpu_custom_call.1} parent=1 // pred_region
      %27 = vsyncadd [#allocation6], 0
      %s28 = sshll.u32 %s1, 4
      %s29 = int_to_ptr.hbm [resolvable:$true] %s28
      %s30 = sshll.u32 [#allocation5], 4
      %s31 = int_to_ptr.vmem [resolvable:$true] %s30
      %36 = dma.hbm_to_vmem [thread:$0]  %s29, 128, %s31, [#allocation6], 64, 64, 4
    $region9: #{tpu_custom_call.1} parent=1 // pred_fallthru
      _
    // Predicated region
    $region10: #{tpu_custom_call.1} parent=1 // pred_check
      _
    $region11: #{tpu_custom_call.1} parent=1 // pred_check_branch
      %38 = sbr.rel (0) target = $region13
    $region12: #{tpu_custom_call.1} parent=1 // pred_region
      _
    $region13: #{tpu_custom_call.1} parent=1 // pred_fallthru
      _
    // Predicated region
    $region14: #{tpu_custom_call.1} parent=1 // pred_check
      _
    $region15: #{tpu_custom_call.1} parent=1 // pred_check_branch
      %40 = sbr.rel (0) target = $region17
    $region16: #{tpu_custom_call.1} parent=1 // pred_region
      _
    $region17: #{tpu_custom_call.1} parent=1 // pred_fallthru
      _
    // Predicated region
    $region18: #{tpu_custom_call.1} parent=1 // pred_check
      _
    $region19: #{tpu_custom_call.1} parent=1 // pred_check_branch
      %42 = sbr.rel (0) target = $region21
    $region20: #{tpu_custom_call.1} parent=1 // pred_region
      _
    $region21: #{tpu_custom_call.1} parent=1 // pred_fallthru
      _
    // Predicated region
    $region22: #{tpu_custom_call.1} parent=1 // pred_check
      _
    $region23: #{tpu_custom_call.1} parent=1 // pred_check_branch
      %44 = sbr.rel (0) target = $region25
    $region24: #{tpu_custom_call.1} parent=1 // pred_region
      %46 = dma.done [#allocation4], 64
    $region25: #{tpu_custom_call.1} parent=1 // pred_fallthru
      _
    // Predicated region
    $region26: #{tpu_custom_call.1} parent=1 // pred_check
      _
    $region27: #{tpu_custom_call.1} parent=1 // pred_check_branch
      %48 = sbr.rel (0) target = $region29
    $region28: #{tpu_custom_call.1} parent=1 // pred_region
      %50 = dma.done [#allocation6], 128
    $region29: #{tpu_custom_call.1} parent=1 // pred_fallthru
      _
    %v52 = vld [vmem:[#allocation3] sm:$0xf]
    %v53 = vld [vmem:[#allocation5] sm:$0xf]
    %v54 = vld [vmem:[#allocation5 + $0x4] sm:$0xf]
    %v55 = vld [vmem:[%s2] sm:$0x1]
    %v57 = vperm.slane %v55, 0
    %v61 = vunpack.c.l.b16 %v53
    %v62 = vunpack.c.l.b16 %v54
    %v63 = vpack.c.b16 %v62, %v61
    %vm65 = vcmask 130048
    %v67 = vsel %vm65, %v52, 0
    %69 = vmatpush.bf16.msra.mxu0 0
    %70 = vmatpush.bf16.msra.mxu0 0
    %71 = vmatpush.bf16.msra.mxu0 0
    %72 = vmatpush.bf16.msra.mxu0 0
    %73 = vmatpush.bf16.msra.mxu0 0
    %74 = vmatpush.bf16.msra.mxu0 0
    %75 = vmatpush.bf16.msra.mxu0 0
    %76 = vmatpush.bf16.msra.mxu0 %v63
    %77 = vmatmul.bf16.gmra.mxu0 %v67
    %v78 = vpop.f32.mrf.mxu0
    %v79 = vadd.f32 %v57, %v78
    %v80 = vpop.f32.mrf.mxu0
    %81 = vdwg.mxu0
    %v82 = vmax.f32 %v79, 0.0
    %v83 = vld [vmem:[%s3] sm:$0x1]
    %v85 = vperm.slane %v83, 0
    %v87 = vmul.f32 %v82, %v85
    %88 = vadd.xlane.f32.xlu0 %v87
    %v89 = vpop.xlane.xlu0 %88
    %s90 = sld [smem:[#allocation2]]
    %v91 = vstv %s90
    %v92 = vadd.f32 %v89, %v91
    %vm93 = vcmask 7168
    %94 = vst.msk [vmem:[%s5] sm:$0xff] %vm93, %v92
    // Predicated region
    $region30: #{tpu_custom_call.1} parent=1 // pred_check
      _
    $region31: #{tpu_custom_call.1} parent=1 // pred_check_branch
      %96 = sbr.rel (0) target = $region33
    $region32: #{tpu_custom_call.1} parent=1 // pred_region
      _
    $region33: #{tpu_custom_call.1} parent=1 // pred_fallthru
      _
    // Predicated region
    $region34: #{tpu_custom_call.1} parent=1 // pred_check
      _
    $region35: #{tpu_custom_call.1} parent=1 // pred_check_branch
      %98 = sbr.rel (0) target = $region37
    $region36: #{tpu_custom_call.1} parent=1 // pred_region
      _
    $region37: #{tpu_custom_call.1} parent=1 // pred_fallthru
      _
    %99 = vsyncpa [#allocation4], 1
    %100 = vsyncpa [#allocation6], 1

</llo_original>
